<compile_context>
chip_gen: v6e
topology: v6e:2x2x1
jax: 0.10.0
libtpu: 0.0.40
codegen_flags: <defaults>
</compile_context>

<pallas_src>
import jax
import jax.numpy as jnp
from jax.experimental import pallas as pl
from jax.experimental.pallas import tpu as pltpu


# ----------------------------------------------------------------------------
# Pallas kernel: whole-array HBM -> HBM DMA (no VMEM staging, no grid).
# ----------------------------------------------------------------------------
def _hbm_copy_kernel(x_hbm_ref, o_hbm_ref, sem):
    # Single DMA of the full array.  With no compute to overlap, one DMA is
    # already bandwidth-bound; chunking would only add descriptor overhead.
    cp = pltpu.make_async_copy(x_hbm_ref, o_hbm_ref, sem)
    cp.start()
    cp.wait()


# Below ~1 MiB the fixed pallas_call dispatch dominates the copy itself.
_SMALL_BYTES = 1 << 20


def pallas_passthrough(x: jax.Array, force_pallas: bool = False) -> jax.Array:
    """Identity copy of an arbitrary-shape tensor via a direct HBM->HBM DMA.

    For tiny tensors the Pallas call is pure launch overhead, so the input is
    returned unchanged unless `force_pallas` is set (used in tests to make
    sure the kernel path is exercised).
    """
    if x.size == 0:
        return x
    nbytes = x.size * jnp.dtype(x.dtype).itemsize
    if not force_pallas and nbytes < _SMALL_BYTES:
        return x

    return pl.pallas_call(
        _hbm_copy_kernel,
        out_shape=jax.ShapeDtypeStruct(x.shape, x.dtype),
        in_specs=[pl.BlockSpec(memory_space=pl.ANY)],   # raw HBM ref, no auto-DMA
        out_specs=pl.BlockSpec(memory_space=pl.ANY),    # raw HBM ref, no auto-DMA
        scratch_shapes=[pltpu.SemaphoreType.DMA],
    )(x)


# ----------------------------------------------------------------------------
# JAX mirror of models/loss_funcs.py::LossAPI
# ----------------------------------------------------------------------------
class LossAPI:
    """JAX mirror of models/loss_funcs.py::LossAPI."""

    def __init__(self, cfg=None, loss=None):
        self.not_match = 0

    def forward(self, outs, gt=None, size=None, infer=False):
        # Exact reference semantics: always raises before any compute.
        raise NotImplementedError
        if infer:  # pragma: no cover  (unreachable, kept for parity)
            return
        else:
            return

    def __call__(self, *args, **kwargs):
        return self.forward(*args, **kwargs)

    def reset_notmatch(self):
        self.not_match = 0


if __name__ == "__main__":
    key = jax.random.PRNGKey(0)

    # Small NCHW input consistent with a generic loss-API consumer.
    x = jax.random.normal(key, (2, 4, 16, 16), dtype=jnp.float32)

    api = LossAPI(cfg=None, loss=None)

    # Confirm the module's forward semantics (raises NotImplementedError).
    try:
        api(x)
        raise RuntimeError("forward() should have raised NotImplementedError")
    except NotImplementedError:
        pass

    api.reset_notmatch()
    assert api.not_match == 0

    # 1) Tiny input: force the Pallas path so the DMA kernel is exercised once
    #    (normally bypassed — copying 8 KiB is cheaper than a kernel launch).
    y = pallas_passthrough(x, force_pallas=True)
    jax.block_until_ready(y)
    assert y.shape == x.shape and y.dtype == x.dtype
    assert bool(jnp.all(y == x))

    # 2) Larger bf16 input (> 1 MiB): exercises the size-gated kernel path and
    #    a narrow dtype — no dtype-dependent tiling is needed with the direct
    #    HBM->HBM DMA.
    k2 = jax.random.PRNGKey(1)
    x_big = jax.random.normal(k2, (4, 8, 160, 128), dtype=jnp.float32).astype(
        jnp.bfloat16
    )
    y_big = pallas_passthrough(x_big)
    jax.block_until_ready(y_big)
    assert y_big.shape == x_big.shape and y_big.dtype == x_big.dtype
    assert bool(jnp.all(y_big == x_big))

    print("KERNEL_OK")
</pallas_src>

<mosaic_0001>
module attributes {stable_mosaic.version = 11 : i64} {
  func.func @_hbm_copy_kernel(%arg0: memref<2x4x16x16xf32, #tpu.memory_space<any>>, %arg1: memref<2x4x16x16xf32, #tpu.memory_space<any>>, %arg2: memref<!tpu.dma_semaphore, #tpu.memory_space<semaphore_mem>>) attributes {dimension_semantics = [], scalar_prefetch = 0 : i64, scratch_operands = 1 : i64, tpu.core_type = #tpu.core_type<tc>} {
    tpu.enqueue_dma source(%arg0 : memref<2x4x16x16xf32, #tpu.memory_space<any>>) target(%arg1 : memref<2x4x16x16xf32, #tpu.memory_space<any>>) target_semaphore(%arg2 : memref<!tpu.dma_semaphore, #tpu.memory_space<semaphore_mem>>)
    tpu.wait_dma2 semaphore(%arg2 : memref<!tpu.dma_semaphore, #tpu.memory_space<semaphore_mem>>) src(%arg0 : memref<2x4x16x16xf32, #tpu.memory_space<any>>) dst(%arg1 : memref<2x4x16x16xf32, #tpu.memory_space<any>>)
    return
  }
}

</mosaic_0001>

<llo_original>
// kernel: tpu_custom_call.1
$region0: #{tpu_custom_call.1}
  #allocation0 [shape = 'u32[]', space=smem, size = 0x4, offset = 0x4, fixed_abs, tag = 'smem constant byte address 0x4 - core index']
  #allocation1 [shape = 'u32[144,128]{1,0:T(1,128)}', space=vmem, size = 0x12000, scoped, tag = 'internal scratch']
  #allocation2 [shape = 's32[1]{0}', space=sflag, size = 0x4, scoped, tag = 'scratch operand']
  #allocation3 [shape = 's32[]', space=sflag, size = 0x4, offset = 0, fixed_abs, tag = 'sflag constant byte address 0x0 - dummy sync flag']
  #allocation4 [shape = 'u32[0]{0}', space=smem, size = 0, offset = 0, fixed_abs, tag = 'smem constant byte address 0x0 - null']
  %s0 = inlined_call_operand.hbm [shape: f32[2,4,16,16], index: 0, kind: input, shape index: {}]
  %s1 = inlined_call_operand.hbm [shape: f32[2,4,16,16], index: 1, kind: output, shape index: {}]
  %s2 = sld [smem:[#allocation0]]
  $region2: #{tpu_custom_call.1} parent=0
    _
  %s4 = ssub.s32 1, %s2
  %s5 = scalar_select 0, %s4, %s2
  %s7 = sshll.u32 1, 14
  %s8 = sxor.u32 4294967295, %s7
  %12 = dma.general %s0, 2048, %s1, [#allocation2], 131072, [#allocation4], 0, 0
  %s13 = smul.u32 2, 4
  %s14 = smul.u32 %s13, 16
  %s15 = smul.u32 %s14, 1
  %s16 = sshll.u32 %s15, 4
  %17 = dma.done [#allocation2], %s16
  %18 = vsyncmov [#allocation2]
  %s19 = vpop.sfrf %18
  %p20 = scmp.eq.s32.totalorder %s19, 0
  %p21 = pneg %p20
  %23 = shalt.err (%p21)

</llo_original>
